<compile_context>
chip_gen: v5e
topology: v5e:2x2
jax: 0.10.0
libtpu: 0.0.40
codegen_flags: <defaults>
</compile_context>

<pallas_src>
import numpy as np
import jax
import jax.numpy as jnp
from jax import lax
from jax.experimental import pallas as pl
from jax.experimental.pallas import tpu as pltpu


def _round_up(x, m):
    return ((x + m - 1) // m) * m


def _steer_lmhead_kernel(x_ref, coef_ref, p2_ref, w_ref, out_ref, p2w_ref):
    """One grid step == one (vocab-tile, row-tile) pair.

    x_ref    : VMEM (TILE_M, D)      bf16   flattened (B*T) rows of `state`
    coef_ref : VMEM (TILE_M, S*R)    f32    epsilon * steer * (state @ P1cat)
    p2_ref   : VMEM (S*R, D)         bf16   stacked, pre-transposed projector2
    w_ref    : VMEM (TILE_V, D)      bf16   lm_head weight tile (NOT transposed)
    out_ref  : VMEM (TILE_M, TILE_V) f32    logits tile
    p2w_ref  : VMEM scratch (S*R, TILE_V) f32, cached per vocab tile
    """
    # P2cat @ W_tile.T : recompute only when the vocab tile changes (M is the
    # innermost grid axis, so m == 0 marks the first visit of each V tile).
    @pl.when(pl.program_id(1) == 0)
    def _():
        p2w_ref[...] = lax.dot_general(
            p2_ref[...], w_ref[...],
            dimension_numbers=(((1,), (1,)), ((), ())),
            preferred_element_type=jnp.float32)                    # (SR, TV)

    # Main lm_head matmul: contract D against the last dim of the weight tile.
    main = lax.dot_general(
        x_ref[...], w_ref[...],
        dimension_numbers=(((1,), (1,)), ((), ())),
        preferred_element_type=jnp.float32)                        # (TM, TV)

    # Low-rank steering term, added in f32 AFTER accumulation (never rounded
    # into `state`): (TM, SR) x (SR, TV) -- tiny relative to the main matmul.
    steer = jnp.dot(coef_ref[...], p2w_ref[...],
                    preferred_element_type=jnp.float32)            # (TM, TV)

    out_ref[...] = (main + steer).astype(out_ref.dtype)


def projected_adaptor_multiply(state, steer_values, projector1, projector2,
                               lm_head_weight, epsilon, *,
                               tile_m=256, tile_v=1024,
                               weight_dtype=jnp.bfloat16,
                               act_dtype=jnp.bfloat16,
                               out_dtype=jnp.float32,
                               w_buffers=2,
                               vmem_limit_bytes=None):
    """state: (B, T, D); steer_values: (S,) or (B, S); projector1/2: (S, D, R);
    lm_head_weight: (V, D).  Returns (B, T, V) logits in `out_dtype`."""
    B, T, D = state.shape
    S, _, R = projector1.shape
    V, _ = lm_head_weight.shape
    SR = S * R
    M = B * T

    if steer_values.ndim == 1:
        steer_values = jnp.broadcast_to(steer_values[None, :], (B, S))
    steer_values = steer_values.astype(jnp.float32)

    # Stacked projectors: column/row j = s*R + r.
    p1_cat = jnp.transpose(projector1, (1, 0, 2)).reshape(D, SR).astype(jnp.float32)
    p2_cat = jnp.transpose(projector2, (0, 2, 1)).reshape(SR, D).astype(weight_dtype)

    x2d = state.reshape(M, D)

    # Steer coefficients with epsilon folded in: O(M*D*S*R), computed once per
    # call (hoisted out of the kernel's inner loop entirely).
    tmp = jnp.dot(x2d.astype(jnp.float32), p1_cat)                       # (M, SR)
    scale = jnp.repeat(jnp.repeat(steer_values, T, axis=0), R, axis=1)   # (M, SR)
    coef = (jnp.float32(epsilon) * scale * tmp).astype(jnp.float32)

    x2d = x2d.astype(act_dtype)
    # NOTE: store lm_head.weight in `weight_dtype` at parameter-load time so
    # this cast is a no-op; it is only here so the demo can pass an f32 array.
    w = (lm_head_weight if lm_head_weight.dtype == weight_dtype
         else lm_head_weight.astype(weight_dtype))

    # Tile sizes: multiples of (8, 128), clamped to the (padded) problem size.
    # Prefer tiles that divide M and V so the pad / slice below are no-ops.
    tile_m = max(8, _round_up(min(tile_m, _round_up(M, 8)), 8))
    tile_v = max(128, _round_up(min(tile_v, _round_up(V, 128)), 128))
    m_pad = _round_up(M, tile_m)
    v_pad = _round_up(V, tile_v)
    if m_pad != M:
        x2d = jnp.pad(x2d, ((0, m_pad - M), (0, 0)))
        coef = jnp.pad(coef, ((0, m_pad - M), (0, 0)))
    if v_pad != V:
        w = jnp.pad(w, ((0, v_pad - V), (0, 0)))

    grid = (v_pad // tile_v, m_pad // tile_m)   # M innermost: W tile DMA'd once

    if vmem_limit_bytes is None:
        xb = np.dtype(act_dtype).itemsize
        wb = np.dtype(weight_dtype).itemsize
        ob = np.dtype(out_dtype).itemsize
        need = (2 * tile_m * D * xb          # x tile (double-buffered)
                + 2 * tile_m * SR * 4        # coef tile
                + 2 * SR * D * wb            # P2cat
                + w_buffers * tile_v * D * wb  # weight tile
                + 2 * tile_m * tile_v * ob   # output tile
                + SR * tile_v * 4)           # p2w scratch
        vmem_limit_bytes = int(min(100 * 2**20, max(32 * 2**20, need * 5 // 4)))

    w_spec_kwargs = {} if w_buffers == 2 else {"pipeline_mode": pl.Buffered(w_buffers)}

    out = pl.pallas_call(
        _steer_lmhead_kernel,
        out_shape=jax.ShapeDtypeStruct((m_pad, v_pad), out_dtype),
        grid=grid,
        in_specs=[
            pl.BlockSpec((tile_m, D), lambda v, m: (m, 0)),    # state rows (bf16)
            pl.BlockSpec((tile_m, SR), lambda v, m: (m, 0)),   # steer coefficients
            pl.BlockSpec((SR, D), lambda v, m: (0, 0)),        # P2cat (resident)
            pl.BlockSpec((tile_v, D), lambda v, m: (v, 0),     # lm_head weight tile
                         **w_spec_kwargs),
        ],
        out_specs=pl.BlockSpec((tile_m, tile_v), lambda v, m: (m, v)),
        scratch_shapes=[pltpu.VMEM((SR, tile_v), jnp.float32)],
        compiler_params=pltpu.CompilerParams(
            # V parallel (megacore may shard it; each core keeps W DMA'd once),
            # M arbitrary (preserves the per-V-tile p2w cache ordering).
            dimension_semantics=("parallel", "arbitrary"),
            vmem_limit_bytes=vmem_limit_bytes),
    )(x2d, coef, p2_cat, w)

    if m_pad != M or v_pad != V:
        out = out[:M, :V]
    return out.reshape(B, T, V)


# ----------------------------------------------------------------------------
# References
# ----------------------------------------------------------------------------
def _reference_module(state, steer_values, p1, p2, w, epsilon):
    """Full-f32 reproduction of the PyTorch module's non-zero-steer path."""
    B, T, D = state.shape
    S = p1.shape[0]
    if steer_values.ndim == 1:
        steer_values = jnp.broadcast_to(steer_values[None, :], (B, S))
    tmp = jnp.einsum('btd,sdr->bstr', state, p1)
    tmp = tmp * steer_values[:, :, None, None]
    delta = jnp.einsum('bstr,sdr->btd', tmp, p2)
    projected = state + epsilon * delta
    return jnp.einsum('btd,vd->btv', projected, w)


def _reference_recipe(state, steer_values, p1, p2, w, epsilon,
                      weight_dtype=jnp.bfloat16, act_dtype=jnp.bfloat16):
    """Plain-JAX mirror of the kernel's exact numerical recipe."""
    B, T, D = state.shape
    S, _, R = p1.shape
    V = w.shape[0]
    M, SR = B * T, S * R
    if steer_values.ndim == 1:
        steer_values = jnp.broadcast_to(steer_values[None, :], (B, S))
    steer_values = steer_values.astype(jnp.float32)
    p1_cat = jnp.transpose(p1, (1, 0, 2)).reshape(D, SR).astype(jnp.float32)
    p2_cat = jnp.transpose(p2, (0, 2, 1)).reshape(SR, D).astype(weight_dtype)
    x2d = state.reshape(M, D)
    tmp = jnp.dot(x2d.astype(jnp.float32), p1_cat)
    scale = jnp.repeat(jnp.repeat(steer_values, T, axis=0), R, axis=1)
    coef = jnp.float32(epsilon) * scale * tmp
    wq = w.astype(weight_dtype)
    main = lax.dot_general(x2d.astype(act_dtype), wq,
                           dimension_numbers=(((1,), (1,)), ((), ())),
                           preferred_element_type=jnp.float32)
    p2w = lax.dot_general(p2_cat, wq,
                          dimension_numbers=(((1,), (1,)), ((), ())),
                          preferred_element_type=jnp.float32)
    return (main + jnp.dot(coef, p2w)).reshape(B, T, V)


if __name__ == "__main__":
    # Small shapes consistent with the module: batch=2, seq=8, embed=32,
    # vocab=256, num_steers=2, rank=4.
    B, T, D, V, S, R = 2, 8, 32, 256, 2, 4
    epsilon = 1e-3
    init_var = 1e-2

    key = jax.random.PRNGKey(0)
    k1, k2, k3, k4 = jax.random.split(key, 4)

    projector1 = jax.random.normal(k1, (S, D, R), jnp.float32) * init_var
    projector2 = jax.random.normal(k2, (S, D, R), jnp.float32) * init_var
    lm_head_w = jax.random.normal(k3, (V, D), jnp.float32) * 0.02
    state = jax.random.normal(k4, (B, T, D), jnp.float32)
    steer_values = jnp.array([1.0, -0.5], jnp.float32)   # non-zero steer path

    # tile_m=8 / tile_v=128 -> grid (2 vocab tiles, 2 row tiles): exercises both
    # the weight streaming and the per-V-tile p2w scratch caching / reuse.
    logits = projected_adaptor_multiply(state, steer_values, projector1,
                                        projector2, lm_head_w, epsilon,
                                        tile_m=8, tile_v=128)
    logits = jax.block_until_ready(logits)
    assert logits.shape == (B, T, V)

    # Exact-recipe reference (same bf16 casts / f32 accumulation as the kernel).
    ref_recipe = _reference_recipe(state, steer_values, projector1, projector2,
                                   lm_head_w, epsilon)
    assert jnp.allclose(logits, ref_recipe, atol=1e-4, rtol=1e-4), \
        "mismatch vs same-recipe reference"

    # Full-f32 module-semantics reference (loose tolerance: bf16 input rounding).
    ref_f32 = _reference_module(state, steer_values, projector1, projector2,
                                lm_head_w, epsilon)
    assert jnp.allclose(logits, ref_f32, atol=1e-2), "mismatch vs f32 reference"

    # Zero-steer values: the full path reduces to plain state @ W.T, matching the
    # module's host-side shortcut (no special-casing needed).
    # TODO(synk): the module's `steer_values.abs().sum() == 0` shortcut is a
    # host-side Python branch; under jit it would be data-dependent, so it is
    # intentionally not reproduced.
    zeros = jnp.zeros((S,), jnp.float32)
    logits0 = jax.block_until_ready(
        projected_adaptor_multiply(state, zeros, projector1, projector2,
                                   lm_head_w, epsilon, tile_m=8, tile_v=128))
    ref0 = _reference_recipe(state, zeros, projector1, projector2, lm_head_w, epsilon)
    assert jnp.allclose(logits0, ref0, atol=1e-4, rtol=1e-4), "mismatch (zero steer)"

    print("KERNEL_OK")
</pallas_src>

<mosaic_0001>
module attributes {stable_mosaic.version = 11 : i64} {
  func.func @_steer_lmhead_kernel(%arg0: i32, %arg1: i32, %arg2: memref<8x32xbf16, #tpu.memory_space<vmem>>, %arg3: memref<8x8xf32, #tpu.memory_space<vmem>>, %arg4: memref<8x32xbf16, #tpu.memory_space<vmem>>, %arg5: memref<128x32xbf16, #tpu.memory_space<vmem>>, %arg6: memref<8x128xf32, #tpu.memory_space<vmem>>, %arg7: memref<8x128xf32, #tpu.memory_space<vmem>>) attributes {dimension_semantics = [#tpu.dimension_semantics<parallel>, #tpu.dimension_semantics<arbitrary>], iteration_bounds = array<i64: 2, 2>, scalar_prefetch = 0 : i64, scratch_operands = 1 : i64, tpu.core_type = #tpu.core_type<tc>, window_params = [{transform_indices = @transform_0, window_bounds = array<i64: 8, 32>}, {transform_indices = @transform_1, window_bounds = array<i64: 8, 8>}, {pipeline_mode = #tpu.pipeline_mode<synchronous>, transform_indices = @transform_2, window_bounds = array<i64: 8, 32>}, {transform_indices = @transform_3, window_bounds = array<i64: 128, 32>}, {transform_indices = @transform_4, window_bounds = array<i64: 8, 128>}]} {
    %c0_i32 = arith.constant 0 : i32
    %0 = arith.cmpi eq, %arg1, %c0_i32 : i32
    %1 = arith.extui %0 : i1 to i32
    %c0_i32_0 = arith.constant 0 : i32
    %2 = arith.cmpi ne, %1, %c0_i32_0 : i32
    scf.if %2 {
      %c0_11 = arith.constant 0 : index
      %c0_12 = arith.constant 0 : index
      %11 = vector.load %arg4[%c0_11, %c0_12] : memref<8x32xbf16, #tpu.memory_space<vmem>>, vector<8x32xbf16>
      %c0_13 = arith.constant 0 : index
      %c0_14 = arith.constant 0 : index
      %12 = vector.load %arg5[%c0_13, %c0_14] : memref<128x32xbf16, #tpu.memory_space<vmem>>, vector<128x32xbf16>
      %cst_15 = arith.constant dense<0.000000e+00> : vector<8x128xf32>
      %13 = tpu.matmul %11, %12, %cst_15 {dimension_numbers = #tpu.dot_dimension_numbers<[1], [1], [0], [0], [0, 0, 1, 0], [], []>} : vector<8x32xbf16>, vector<128x32xbf16>, vector<8x128xf32> -> vector<8x128xf32>
      %c0_16 = arith.constant 0 : index
      %c0_17 = arith.constant 0 : index
      %14 = vector.load %arg7[%c0_16, %c0_17] : memref<8x128xf32, #tpu.memory_space<vmem>>, vector<8x128xf32>
      tpu.vector_store %arg7[%c0_16, %c0_17], %13 {strides = array<i32>} : memref<8x128xf32, #tpu.memory_space<vmem>>, vector<8x128xf32>,
    } else {
    }
    %c0 = arith.constant 0 : index
    %c0_1 = arith.constant 0 : index
    %3 = vector.load %arg2[%c0, %c0_1] : memref<8x32xbf16, #tpu.memory_space<vmem>>, vector<8x32xbf16>
    %c0_2 = arith.constant 0 : index
    %c0_3 = arith.constant 0 : index
    %4 = vector.load %arg5[%c0_2, %c0_3] : memref<128x32xbf16, #tpu.memory_space<vmem>>, vector<128x32xbf16>
    %cst = arith.constant dense<0.000000e+00> : vector<8x128xf32>
    %5 = tpu.matmul %3, %4, %cst {dimension_numbers = #tpu.dot_dimension_numbers<[1], [1], [0], [0], [0, 0, 1, 0], [], []>} : vector<8x32xbf16>, vector<128x32xbf16>, vector<8x128xf32> -> vector<8x128xf32>
    %c0_4 = arith.constant 0 : index
    %c0_5 = arith.constant 0 : index
    %6 = vector.load %arg3[%c0_4, %c0_5] : memref<8x8xf32, #tpu.memory_space<vmem>>, vector<8x8xf32>
    %c0_6 = arith.constant 0 : index
    %c0_7 = arith.constant 0 : index
    %7 = vector.load %arg7[%c0_6, %c0_7] : memref<8x128xf32, #tpu.memory_space<vmem>>, vector<8x128xf32>
    %cst_8 = arith.constant dense<0.000000e+00> : vector<8x128xf32>
    %8 = tpu.matmul %6, %7, %cst_8 {dimension_numbers = #tpu.dot_dimension_numbers<[1], [0], [0], [1], [0, 0, 1, 1], [], []>} : vector<8x8xf32>, vector<8x128xf32>, vector<8x128xf32> -> vector<8x128xf32>
    %9 = arith.addf %5, %8 : vector<8x128xf32>
    %c0_9 = arith.constant 0 : index
    %c0_10 = arith.constant 0 : index
    %10 = vector.load %arg6[%c0_9, %c0_10] : memref<8x128xf32, #tpu.memory_space<vmem>>, vector<8x128xf32>
    tpu.vector_store %arg6[%c0_9, %c0_10], %9 {strides = array<i32>} : memref<8x128xf32, #tpu.memory_space<vmem>>, vector<8x128xf32>,
    return
  }
  func.func @transform_0(%arg0: i32, %arg1: i32) -> (i32, i32) {
    %c0_i32 = arith.constant 0 : i32
    %c0_i32_0 = arith.constant 0 : i32
    return %arg1, %c0_i32 : i32, i32
  }
  func.func @transform_1(%arg0: i32, %arg1: i32) -> (i32, i32) {
    %c0_i32 = arith.constant 0 : i32
    %c0_i32_0 = arith.constant 0 : i32
    return %arg1, %c0_i32 : i32, i32
  }
  func.func @transform_2(%arg0: i32, %arg1: i32) -> (i32, i32) {
    %c0_i32 = arith.constant 0 : i32
    %c0_i32_0 = arith.constant 0 : i32
    %c0_i32_1 = arith.constant 0 : i32
    return %c0_i32, %c0_i32_0 : i32, i32
  }
  func.func @transform_3(%arg0: i32, %arg1: i32) -> (i32, i32) {
    %c0_i32 = arith.constant 0 : i32
    %c0_i32_0 = arith.constant 0 : i32
    return %arg0, %c0_i32 : i32, i32
  }
  func.func @transform_4(%arg0: i32, %arg1: i32) -> (i32, i32) {
    %c0_i32 = arith.constant 0 : i32
    return %arg1, %arg0 : i32, i32
  }
}

</mosaic_0001>

<llo_original>
// kernel: tpu_custom_call.1
$region0: #{tpu_custom_call.1}
  #allocation0 [shape = 'u32[]', space=smem, size = 0x4, offset = 0x4, fixed_abs, tag = 'smem constant byte address 0x4 - core index']
  #allocation1 [shape = 'u32[72,128]{1,0:T(1,128)}', space=vmem, size = 0x9000, scoped, tag = 'internal scratch']
  #allocation2 [shape = 'f32[8,128]{1,0:T(8,128)}', space=vmem, size = 0x1000, scoped, tag = 'scratch operand']
  %s0 = inlined_call_operand.vmem [shape: bf16[16,32], index: 0, kind: input, shape index: {}]
  %s1 = inlined_call_operand.vmem [shape: f32[16,8], index: 1, kind: input, shape index: {}]
  %s2 = inlined_call_operand.vmem [shape: bf16[8,32], index: 2, kind: input, shape index: {}]
  %s3 = inlined_call_operand.vmem [shape: bf16[256,32], index: 3, kind: input, shape index: {}]
  %s4 = inlined_call_operand.hbm [shape: f32[16,256], index: 4, kind: output, shape index: {}]
  %s5 = sld [smem:[#allocation0]]
  $region53: #{tpu_custom_call.1} parent=0
    _
  %s7 = ssub.s32 1, %s5
  %s8 = scalar_select 0, %s7, %s5
  $region1: #{tpu_custom_call.1} parent=0
    #allocation3 [shape = 'u8[8192]{0}', space=vmem, size = 0x2000, scoped, tag = 'output window, operand 0']
    #allocation4 [shape = 's32[2]{0}', space=sflag, size = 0x8, scoped, tag = 'scoped memory for tpu_custom_call.1']
    %9 = vsyncpa [#allocation4], 0
    %s10 = scalar_lea.sflag [#allocation4], 1
    %11 = vsyncpa %s10, 0
    loop: start=0, step=1, limit=6
    $region2: #{tpu_custom_call.1} parent=1 // loop_pre_header
      _
    $region3: #{tpu_custom_call.1} parent=1 // loop_header
      %s13 = sphi 0, %s17
      %p14 = scmp.ge.s32.totalorder %s13, 6
      %s20 = sphi 0, %s32
      %s21 = sphi 0, %s28
      %s22 = sphi 0, %s20
      %s23 = sphi 0, %s21
      %s24 = sphi 0, %s22
      %s25 = sphi 0, %s23
      %s35 = sphi 0, %s37
      %s38 = sphi 0, %s35
      %s39 = sphi 0, %s38
      %s55 = sphi 0, %s39
      %s61 = sphi 0, %s63
      %s64 = sphi 0, %s61
      %s65 = sphi 0, %s64
      %s81 = sphi 0, %s65
      %s85 = sphi 0, %s85
      %s87 = sphi 0, %s85
      %s88 = sphi 0, %s87
      %s102 = sphi 0, %s88
      %s108 = sphi 0, %s110
      %s111 = sphi 0, %s108
      %s112 = sphi 0, %s111
      %s128 = sphi 0, %s112
      %s136 = sphi 0, %s138
      %s139 = sphi 0, %s136
      %s140 = sphi 0, %s139
      %s156 = sphi 0, %s140
    $region4: #{tpu_custom_call.1} parent=1 // loop_header_branch
      %16 = sbr.rel (%p14) target = $region8
    $region5: #{tpu_custom_call.1} parent=1 // loop_body
      %s18 = ssub.s32 %s13, 1
      %s19 = ssub.s32 %s13, 2
      %s26 = sadd.s32 1, %s21
      %p27 = scmp.ge.s32.totalorder %s26, 2
      %s28 = scalar_select %p27, 0, %s26
      %s29 = sadd.s32 1, %s20
      %s30 = scalar_select %p27, %s29, %s20
      %p31 = scmp.ge.s32.totalorder %s30, 2
      %s32 = scalar_select %p31, 0, %s30
      %s33 = ssub.s32 %s21, %s28
      %p34 = scmp.eq.s32.totalorder %s33, 0
      %s36 = sadd.s32 %s35, 1
      %s37 = scalar_select %p34, %s35, %s36
      %p40 = pneg %p34
      %p41 = scmp.eq.s32.totalorder %s13, 3
      %p42 = por %p40, %p41
      %p43 = scmp.ne.s32.totalorder %s35, %s38
      %p44 = scmp.eq.s32.totalorder %s13, 0
      %p45 = por %p43, %p44
      %p46 = scmp.ne.s32.totalorder %s35, %s38
      %p47 = scmp.eq.s32.totalorder %s18, 3
      %p48 = por %p46, %p47
      %p49 = scmp.ne.s32.totalorder %s38, %s39
      %p50 = scmp.eq.s32.totalorder %s18, 0
      %p51 = por %p49, %p50
      %p52 = scmp.ne.s32.totalorder %s38, %s39
      %p53 = scmp.eq.s32.totalorder %s19, 3
      %p54 = por %p52, %p53
      %p56 = scmp.ne.s32.totalorder %s39, %s55
      %p57 = scmp.eq.s32.totalorder %s19, 0
      %p58 = por %p56, %p57
      %s59 = ssub.s32 %s21, %s28
      %p60 = scmp.eq.s32.totalorder %s59, 0
      %s62 = sadd.s32 %s61, 1
      %s63 = scalar_select %p60, %s61, %s62
      %p66 = pneg %p60
      %p67 = scmp.eq.s32.totalorder %s13, 3
      %p68 = por %p66, %p67
      %p69 = scmp.ne.s32.totalorder %s61, %s64
      %p70 = scmp.eq.s32.totalorder %s13, 0
      %p71 = por %p69, %p70
      %p72 = scmp.ne.s32.totalorder %s61, %s64
      %p73 = scmp.eq.s32.totalorder %s18, 3
      %p74 = por %p72, %p73
      %p75 = scmp.ne.s32.totalorder %s64, %s65
      %p76 = scmp.eq.s32.totalorder %s18, 0
      %p77 = por %p75, %p76
      %p78 = scmp.ne.s32.totalorder %s64, %s65
      %p79 = scmp.eq.s32.totalorder %s19, 3
      %p80 = por %p78, %p79
      %p82 = scmp.ne.s32.totalorder %s65, %s81
      %p83 = scmp.eq.s32.totalorder %s19, 0
      %p84 = por %p82, %p83
      %s86 = sadd.s32 %s85, 1
      %p89 = scmp.eq.s32.totalorder %s13, 3
      %p90 = scmp.ne.s32.totalorder %s85, %s87
      %p91 = scmp.eq.s32.totalorder %s13, 0
      %p92 = por %p90, %p91
      %p93 = scmp.ne.s32.totalorder %s85, %s87
      %p94 = scmp.eq.s32.totalorder %s18, 3
      %p95 = por %p93, %p94
      %p96 = scmp.ne.s32.totalorder %s87, %s88
      %p97 = scmp.eq.s32.totalorder %s18, 0
      %p98 = por %p96, %p97
      %p99 = scmp.ne.s32.totalorder %s87, %s88
      %p100 = scmp.eq.s32.totalorder %s19, 3
      %p101 = por %p99, %p100
      %p103 = scmp.ne.s32.totalorder %s88, %s102
      %p104 = scmp.eq.s32.totalorder %s19, 0
      %p105 = por %p103, %p104
      %s106 = ssub.s32 %s20, %s32
      %p107 = scmp.eq.s32.totalorder %s106, 0
      %s109 = sadd.s32 %s108, 1
      %s110 = scalar_select %p107, %s108, %s109
      %p113 = pneg %p107
      %p114 = scmp.eq.s32.totalorder %s13, 3
      %p115 = por %p113, %p114
      %p116 = scmp.ne.s32.totalorder %s108, %s111
      %p117 = scmp.eq.s32.totalorder %s13, 0
      %p118 = por %p116, %p117
      %p119 = scmp.ne.s32.totalorder %s108, %s111
      %p120 = scmp.eq.s32.totalorder %s18, 3
      %p121 = por %p119, %p120
      %p122 = scmp.ne.s32.totalorder %s111, %s112
      %p123 = scmp.eq.s32.totalorder %s18, 0
      %p124 = por %p122, %p123
      %p125 = scmp.ne.s32.totalorder %s111, %s112
      %p126 = scmp.eq.s32.totalorder %s19, 3
      %p127 = por %p125, %p126
      %p129 = scmp.ne.s32.totalorder %s112, %s128
      %p130 = scmp.eq.s32.totalorder %s19, 0
      %p131 = por %p129, %p130
      %s132 = ssub.s32 %s21, %s28
      %s133 = ssub.s32 %s20, %s32
      %s134 = sor.u32 %s132, %s133
      %p135 = scmp.eq.s32.totalorder %s134, 0
      %s137 = sadd.s32 %s136, 1
      %s138 = scalar_select %p135, %s136, %s137
      %p141 = pneg %p135
      %p142 = scmp.eq.s32.totalorder %s13, 3
      %p143 = por %p141, %p142
      %p144 = scmp.ne.s32.totalorder %s136, %s139
      %p145 = scmp.eq.s32.totalorder %s13, 0
      %p146 = por %p144, %p145
      %p147 = scmp.ne.s32.totalorder %s136, %s139
      %p148 = scmp.eq.s32.totalorder %s18, 3
      %p149 = por %p147, %p148
      %p150 = scmp.ne.s32.totalorder %s139, %s140
      %p151 = scmp.eq.s32.totalorder %s18, 0
      %p152 = por %p150, %p151
      %p153 = scmp.ne.s32.totalorder %s139, %s140
      %p154 = scmp.eq.s32.totalorder %s19, 3
      %p155 = por %p153, %p154
      %p157 = scmp.ne.s32.totalorder %s140, %s156
      %p158 = scmp.eq.s32.totalorder %s19, 0
      %p159 = por %p157, %p158
      %p160 = scmp.le.s32.totalorder 1, %s13
      %p161 = scmp.lt.s32.totalorder %s13, 5
      %p162 = pnand %p160, %p161
      %p163 = pneg %p162
      // Predicated region
      $region9: #{tpu_custom_call.1} parent=5 // pred_check
        _
      $region10: #{tpu_custom_call.1} parent=5 // pred_check_branch
        %165 = sbr.rel (%p162) target = $region12
      $region11: #{tpu_custom_call.1} parent=5 // pred_region
        %s166 = ssub.s32 %s13, 1
        // Predicated region
        $region13: #{tpu_custom_call.1} parent=11 // pred_check
          %p167 = pneg %p98
        $region14: #{tpu_custom_call.1} parent=11 // pred_check_branch
          %169 = sbr.rel (%p167) target = $region16
        $region15: #{tpu_custom_call.1} parent=11 // pred_region
          _
        $region16: #{tpu_custom_call.1} parent=11 // pred_fallthru
          _
      $region12: #{tpu_custom_call.1} parent=5 // pred_fallthru
        _
      %p170 = scmp.lt.s32.totalorder %s13, 4
      // Predicated region
      $region17: #{tpu_custom_call.1} parent=5 // pred_check
        %p171 = pneg %p170
      $region18: #{tpu_custom_call.1} parent=5 // pred_check_branch
        %173 = sbr.rel (%p171) target = $region20
      $region19: #{tpu_custom_call.1} parent=5 // pred_region
        // Predicated region
        $region21: #{tpu_custom_call.1} parent=19 // pred_check
          %p174 = pneg %p45
        $region22: #{tpu_custom_call.1} parent=19 // pred_check_branch
          %176 = sbr.rel (%p174) target = $region24
        $region23: #{tpu_custom_call.1} parent=19 // pred_region
          %p177 = scmp.lt.s32.totalorder %s21, 1
          %s178 = scalar_select %p177, %s21, 1
          %s179 = smul.addr %s178, 4
          %s180 = scalar_lea.vmem %s0, %s179
        $region24: #{tpu_custom_call.1} parent=19 // pred_fallthru
          _
        // Predicated region
        $region25: #{tpu_custom_call.1} parent=19 // pred_check
          %p181 = pneg %p71
        $region26: #{tpu_custom_call.1} parent=19 // pred_check_branch
          %183 = sbr.rel (%p181) target = $region28
        $region27: #{tpu_custom_call.1} parent=19 // pred_region
          %p184 = scmp.lt.s32.totalorder %s21, 1
          %s185 = scalar_select %p184, %s21, 1
          %s186 = smul.addr %s185, 8
          %s187 = scalar_lea.vmem %s1, %s186
        $region28: #{tpu_custom_call.1} parent=19 // pred_fallthru
          _
        // Predicated region
        $region29: #{tpu_custom_call.1} parent=19 // pred_check
          %p188 = pneg %p118
        $region30: #{tpu_custom_call.1} parent=19 // pred_check_branch
          %190 = sbr.rel (%p188) target = $region32
        $region31: #{tpu_custom_call.1} parent=19 // pred_region
          %s191 = smul.u32 16, %s20
          %p192 = scmp.lt.s32.totalorder %s191, 31
          %s193 = scalar_select %p192, %s191, 31
          %s194 = smul.addr %s193, 4
          %s195 = scalar_lea.vmem %s3, %s194
          %s196 = smul.u32 16, %s20
        $region32: #{tpu_custom_call.1} parent=19 // pred_fallthru
          _
      $region20: #{tpu_custom_call.1} parent=5 // pred_fallthru
        _
      %p197 = scmp.le.s32.totalorder 1, %s13
      %p198 = scmp.lt.s32.totalorder %s13, 5
      %p199 = pnand %p197, %p198
      %p200 = pneg %p199
      // Predicated region
      $region33: #{tpu_custom_call.1} parent=5 // pred_check
        _
      $region34: #{tpu_custom_call.1} parent=5 // pred_check_branch
        %202 = sbr.rel (%p199) target = $region36
      $region35: #{tpu_custom_call.1} parent=5 // pred_region
        %s203 = ssub.s32 %s13, 1
        %p204 = scmp.lt.s32.totalorder %s23, 1
        %s205 = scalar_select %p204, %s23, 1
        %s206 = smul.addr %s205, 4
        %s207 = scalar_lea.vmem %s0, %s206
        %p208 = pneg %p51
        %p209 = pneg %p48
        %p210 = scmp.lt.s32.totalorder %s23, 1
        %s211 = scalar_select %p210, %s23, 1
        %s212 = smul.addr %s211, 8
        %s213 = scalar_lea.vmem %s1, %s212
        %p214 = pneg %p77
        %p215 = pneg %p74
        %p216 = pneg %p98
        %p217 = pneg %p95
        %s218 = smul.u32 16, %s22
        %p219 = scmp.lt.s32.totalorder %s218, 31
        %s220 = scalar_select %p219, %s218, 31
        %s221 = smul.addr %s220, 4
        %s222 = scalar_lea.vmem %s3, %s221
        %p223 = pneg %p124
        %p224 = pneg %p121
        %p225 = pneg %p152
        %p226 = pneg %p149
        %s227 = sand.u32 %s139, 1
        %s228 = scalar_lea.sflag [#allocation4], %s227
        %s229 = sand.u32 %s139, 1
        %s230 = smul.addr %s229, 8
        %s231 = scalar_lea.vmem [#allocation3], %s230
        %p232 = scmp.lt.s32.totalorder %s23, 1
        %s233 = scalar_select %p232, %s23, 1
        %s234 = smul.addr %s233, 4
        %s235 = scalar_lea.vmem %s0, %s234
        %p236 = scmp.lt.s32.totalorder %s23, 1
        %s237 = scalar_select %p236, %s23, 1
        %s238 = smul.addr %s237, 8
        %s239 = scalar_lea.vmem %s1, %s238
        %s240 = smul.u32 16, %s22
        %p241 = scmp.lt.s32.totalorder %s240, 31
        %s242 = scalar_select %p241, %s240, 31
        %s243 = smul.addr %s242, 4
        %s244 = scalar_lea.vmem %s3, %s243
        %s245 = smul.u32 16, %s22
        %p246 = scmp.eq.s32.totalorder %s23, 0
        // Predicated region
        $region37: #{tpu_custom_call.1} parent=35 // pred_check
          %p247 = pneg %p246
        $region38: #{tpu_custom_call.1} parent=35 // pred_check_branch
          %249 = sbr.rel (%p247) target = $region40
        $region39: #{tpu_custom_call.1} parent=35 // pred_region
          %v250 = vld [vmem:[%s2] sm:$0xf]
          %v251 = vld [vmem:[%s244] sm:$0xf]
          %v252 = vld [vmem:[%s244 + $0x4] sm:$0xf]
          %v253 = vld [vmem:[%s244 + $0x8] sm:$0xf]
          %v254 = vld [vmem:[%s244 + $0xc] sm:$0xf]
          %v255 = vld [vmem:[%s244 + $0x10] sm:$0xf]
          %v256 = vld [vmem:[%s244 + $0x14] sm:$0xf]
          %v257 = vld [vmem:[%s244 + $0x18] sm:$0xf]
          %v258 = vld [vmem:[%s244 + $0x1c] sm:$0xf]
          %v259 = vld [vmem:[%s244 + $0x20] sm:$0xf]
          %v260 = vld [vmem:[%s244 + $0x24] sm:$0xf]
          %v261 = vld [vmem:[%s244 + $0x28] sm:$0xf]
          %v262 = vld [vmem:[%s244 + $0x2c] sm:$0xf]
          %v263 = vld [vmem:[%s244 + $0x30] sm:$0xf]
          %v264 = vld [vmem:[%s244 + $0x34] sm:$0xf]
          %v265 = vld [vmem:[%s244 + $0x38] sm:$0xf]
          %v266 = vld [vmem:[%s244 + $0x3c] sm:$0xf]
          %v283 = vunpack.c.l.b16 %v251
          %v284 = vunpack.c.l.b16 %v252
          %v285 = vunpack.c.l.b16 %v253
          %v286 = vunpack.c.l.b16 %v254
          %v287 = vunpack.c.l.b16 %v255
          %v288 = vunpack.c.l.b16 %v256
          %v289 = vunpack.c.l.b16 %v257
          %v290 = vunpack.c.l.b16 %v258
          %v291 = vunpack.c.l.b16 %v259
          %v292 = vunpack.c.l.b16 %v260
          %v293 = vunpack.c.l.b16 %v261
          %v294 = vunpack.c.l.b16 %v262
          %v295 = vunpack.c.l.b16 %v263
          %v296 = vunpack.c.l.b16 %v264
          %v297 = vunpack.c.l.b16 %v265
          %v298 = vunpack.c.l.b16 %v266
          %v299 = vpack.c.b16 %v284, %v283
          %v300 = vpack.c.b16 %v286, %v285
          %v301 = vpack.c.b16 %v288, %v287
          %v302 = vpack.c.b16 %v290, %v289
          %v303 = vpack.c.b16 %v292, %v291
          %v304 = vpack.c.b16 %v294, %v293
          %v305 = vpack.c.b16 %v296, %v295
          %v306 = vpack.c.b16 %v298, %v297
          %vm307 = vcmask 261120
          %v309 = vsel %vm307, %v250, 0
          %v312 = vsel %vm307, %v299, 0
          %v315 = vsel %vm307, %v300, 0
          %v318 = vsel %vm307, %v301, 0
          %v321 = vsel %vm307, %v302, 0
          %v324 = vsel %vm307, %v303, 0
          %v327 = vsel %vm307, %v304, 0
          %v330 = vsel %vm307, %v305, 0
          %v333 = vsel %vm307, %v306, 0
          %335 = vmatpush.bf16.xpose.msra.mxu0 %v333
          %336 = vmatpush.bf16.xpose.msra.mxu0 %v330
          %337 = vmatpush.bf16.xpose.msra.mxu0 %v327
          %338 = vmatpush.bf16.xpose.msra.mxu0 %v324
          %339 = vmatpush.bf16.xpose.msra.mxu0 %v321
          %340 = vmatpush.bf16.xpose.msra.mxu0 %v318
          %341 = vmatpush.bf16.xpose.msra.mxu0 %v315
          %342 = vmatpush.bf16.xpose.msra.mxu0 %v312
          %343 = vmatmul.bf16.gmra.mxu0 %v309
          %v344 = vpop.f32.mrf.mxu0
          %v345 = vadd.f32 0.0, %v344
          %v346 = vpop.f32.mrf.mxu0
          %347 = vdwg.mxu0
          %348 = vst [vmem:[#allocation2] sm:$0xff] %v345
        $region40: #{tpu_custom_call.1} parent=35 // pred_fallthru
          _
        %v349 = vld [vmem:[%s235] sm:$0xf]
        %v350 = vld [vmem:[%s244] sm:$0xf]
        %v351 = vld [vmem:[%s244 + $0x4] sm:$0xf]
        %v352 = vld [vmem:[%s244 + $0x8] sm:$0xf]
        %v353 = vld [vmem:[%s244 + $0xc] sm:$0xf]
        %v354 = vld [vmem:[%s244 + $0x10] sm:$0xf]
        %v355 = vld [vmem:[%s244 + $0x14] sm:$0xf]
        %v356 = vld [vmem:[%s244 + $0x18] sm:$0xf]
        %v357 = vld [vmem:[%s244 + $0x1c] sm:$0xf]
        %v358 = vld [vmem:[%s244 + $0x20] sm:$0xf]
        %v359 = vld [vmem:[%s244 + $0x24] sm:$0xf]
        %v360 = vld [vmem:[%s244 + $0x28] sm:$0xf]
        %v361 = vld [vmem:[%s244 + $0x2c] sm:$0xf]
        %v362 = vld [vmem:[%s244 + $0x30] sm:$0xf]
        %v363 = vld [vmem:[%s244 + $0x34] sm:$0xf]
        %v364 = vld [vmem:[%s244 + $0x38] sm:$0xf]
        %v365 = vld [vmem:[%s244 + $0x3c] sm:$0xf]
        %v366 = vld [vmem:[%s239] sm:$0xff]
        %v367 = vld [vmem:[#allocation2] sm:$0xff]
        %vm368 = vcmask 64512
        %v370 = vsel %vm368, %v366, 0
        %372 = vmatpush.msra.mxu0 0.0
        %373 = vmatpush.msra.mxu0 0.0
        %374 = vmatpush.msra.mxu0 0.0
        %375 = vmatpush.msra.mxu0 0.0
        %376 = vmatpush.msra.mxu0 0.0
        %377 = vmatpush.msra.mxu0 0.0
        %378 = vmatpush.msra.mxu0 0.0
        %379 = vmatpush.msra.mxu0 0.0
        %380 = vmatpush.msra.mxu0 0.0
        %381 = vmatpush.msra.mxu0 0.0
        %382 = vmatpush.msra.mxu0 0.0
        %383 = vmatpush.msra.mxu0 0.0
        %384 = vmatpush.msra.mxu0 0.0
        %385 = vmatpush.msra.mxu0 0.0
        %386 = vmatpush.msra.mxu0 0.0
        %387 = vmatpush.msra.mxu0 %v367
        %388 = vmatmul.f32.gmra.mxu0 %v370
        %v389 = vpop.f32.mrf.mxu0
        %v390 = vadd.f32 0.0, %v389
        %391 = vdwg.mxu0
        %v408 = vunpack.c.l.b16 %v350
        %v409 = vunpack.c.l.b16 %v351
        %v410 = vunpack.c.l.b16 %v352
        %v411 = vunpack.c.l.b16 %v353
        %v412 = vunpack.c.l.b16 %v354
        %v413 = vunpack.c.l.b16 %v355
        %v414 = vunpack.c.l.b16 %v356
        %v415 = vunpack.c.l.b16 %v357
        %v416 = vunpack.c.l.b16 %v358
        %v417 = vunpack.c.l.b16 %v359
        %v418 = vunpack.c.l.b16 %v360
        %v419 = vunpack.c.l.b16 %v361
        %v420 = vunpack.c.l.b16 %v362
        %v421 = vunpack.c.l.b16 %v363
        %v422 = vunpack.c.l.b16 %v364
        %v423 = vunpack.c.l.b16 %v365
        %v424 = vpack.c.b16 %v409, %v408
        %v425 = vpack.c.b16 %v411, %v410
        %v426 = vpack.c.b16 %v413, %v412
        %v427 = vpack.c.b16 %v415, %v414
        %v428 = vpack.c.b16 %v417, %v416
        %v429 = vpack.c.b16 %v419, %v418
        %v430 = vpack.c.b16 %v421, %v420
        %v431 = vpack.c.b16 %v423, %v422
        %vm432 = vcmask 261120
        %v434 = vsel %vm432, %v349, 0
        %v437 = vsel %vm432, %v424, 0
        %v440 = vsel %vm432, %v425, 0
        %v443 = vsel %vm432, %v426, 0
        %v446 = vsel %vm432, %v427, 0
        %v449 = vsel %vm432, %v428, 0
        %v452 = vsel %vm432, %v429, 0
        %v455 = vsel %vm432, %v430, 0
        %v458 = vsel %vm432, %v431, 0
        %460 = vmatpush.bf16.xpose.msra.mxu0 %v458
        %461 = vmatpush.bf16.xpose.msra.mxu0 %v455
        %462 = vmatpush.bf16.xpose.msra.mxu0 %v452
        %463 = vmatpush.bf16.xpose.msra.mxu0 %v449
        %464 = vmatpush.bf16.xpose.msra.mxu0 %v446
        %465 = vmatpush.bf16.xpose.msra.mxu0 %v443
        %466 = vmatpush.bf16.xpose.msra.mxu0 %v440
        %467 = vmatpush.bf16.xpose.msra.mxu0 %v437
        %468 = vmatmul.bf16.gmra.mxu0 %v434
        %v469 = vpop.f32.mrf.mxu0
        %v470 = vadd.f32 %v390, %v469
        %v471 = vpop.f32.mrf.mxu0
        %472 = vdwg.mxu0
        %473 = vst [vmem:[%s231] sm:$0xff] %v470
        %s474 = sand.u32 %s139, 1
        %s475 = scalar_lea.sflag [#allocation4], %s474
        %s476 = sand.u32 %s139, 1
        %s477 = smul.addr %s476, 8
        %s478 = scalar_lea.vmem [#allocation3], %s477
        // Predicated region
        $region41: #{tpu_custom_call.1} parent=35 // pred_check
          %p479 = pneg %p149
        $region42: #{tpu_custom_call.1} parent=35 // pred_check_branch
          %481 = sbr.rel (%p479) target = $region44
        $region43: #{tpu_custom_call.1} parent=35 // pred_region
          %483 = vsyncadd %s475, 0
          %s484 = smul.addr %s23, 2
          %s485 = sadd.s32 %s22, %s484
          %s486 = smul.addr %s485, 8
          %s487 = scalar_lea.hbm %s4, %s486
          %s489 = sshll.u32 %s478, 4
          %s490 = int_to_ptr.vmem [resolvable:$true] %s489
          %s491 = sshll.u32 %s487, 4
          %s492 = int_to_ptr.hbm [resolvable:$true] %s491
          %494 = dma.vmem_to_hbm [thread:$0]  %s490, 128, %s492, %s475
        $region44: #{tpu_custom_call.1} parent=35 // pred_fallthru
          _
      $region36: #{tpu_custom_call.1} parent=5 // pred_fallthru
        _
      %p495 = scmp.le.s32.totalorder 2, %s13
      // Predicated region
      $region45: #{tpu_custom_call.1} parent=5 // pred_check
        %p496 = pneg %p495
      $region46: #{tpu_custom_call.1} parent=5 // pred_check_branch
        %498 = sbr.rel (%p496) target = $region48
      $region47: #{tpu_custom_call.1} parent=5 // pred_region
        %s499 = ssub.s32 %s13, 2
        // Predicated region
        $region49: #{tpu_custom_call.1} parent=47 // pred_check
          %p500 = pneg %p155
        $region50: #{tpu_custom_call.1} parent=47 // pred_check_branch
          %502 = sbr.rel (%p500) target = $region52
        $region51: #{tpu_custom_call.1} parent=47 // pred_region
          %s503 = sand.u32 %s140, 1
          %s504 = scalar_lea.sflag [#allocation4], %s503
          %s505 = sand.u32 %s140, 1
          %s506 = smul.addr %s505, 8
          %s507 = scalar_lea.vmem [#allocation3], %s506
          %509 = dma.done %s504, 128
        $region52: #{tpu_custom_call.1} parent=47 // pred_fallthru
          _
      $region48: #{tpu_custom_call.1} parent=5 // pred_fallthru
        _
    $region6: #{tpu_custom_call.1} parent=1 // loop_footer
      %s17 = sadd.s32 1, %s13
    $region7: #{tpu_custom_call.1} parent=1 // loop_footer_branch
      %12 = sbr.rel target = $region3
    $region8: #{tpu_custom_call.1} parent=1 // loop_exit
      _
    %510 = vsyncpa [#allocation4], 1
    %s511 = scalar_lea.sflag [#allocation4], 1
    %512 = vsyncpa %s511, 1

</llo_original>
